<compile_context>
chip_gen: v5e
topology: v5e:2x2
jax: 0.10.0
libtpu: 0.0.40
codegen_flags: <defaults>
</compile_context>

<pallas_src>
import jax
import jax.numpy as jnp
from jax.experimental import pallas as pl
from jax.experimental.pallas import tpu as pltpu


def _linreg_kernel(w_ref, b_ref, x_ref, o_ref):
    # w_ref / b_ref: (1,) f32 scalars in SMEM.  x_ref / o_ref: VMEM tiles.
    w = w_ref[0]
    b = b_ref[0]
    y = x_ref[...].astype(jnp.float32) * w + b
    o_ref[...] = y.astype(o_ref.dtype)


def _vmem_capacity_bytes():
    try:
        return int(pltpu.get_tpu_info().vmem_capacity_bytes)
    except Exception:
        return 64 << 20  # conservative default (v7x per-TC VMEM)


def _round_down(x, m):
    return (x // m) * m


def linear_regression_forward(x, weights, bias, *, min_pallas_elems=65536):
    """y = weights * x + bias (shape-(1,) params), any input shape.

    Mirrors PyTorch LinearRegressionModel.forward.  Large inputs are streamed
    through a lane-dense (rows, lane) slab with big HBM-roofline blocks; small
    inputs use plain jnp (faster than a kernel launch).
    """
    orig_shape = x.shape
    out_dtype = x.dtype
    n = x.size

    w = jnp.asarray(weights, jnp.float32).reshape((1,))
    b = jnp.asarray(bias, jnp.float32).reshape((1,))

    # Tiny-input short-circuit: XLA's fused elementwise op wins here.
    if n == 0 or n < min_pallas_elems:
        return (w[0] * x.astype(jnp.float32) + b[0]).astype(out_dtype)

    itemsize = jnp.dtype(out_dtype).itemsize
    sub = max(8, 32 // itemsize)  # sublane multiple: 8 f32, 16 bf16, 32 int8/fp8

    # Lane width: largest multiple of 128 (<= 1024) dividing n -> no pad / no
    # post-slice (each would be a full extra HBM pass).  Otherwise 1024 lanes
    # plus a minimal tail pad.
    lane = None
    for cand in (1024, 512, 256, 128):
        if n % cand == 0:
            lane = cand
            break
    padded = lane is None
    if padded:
        lane = 1024

    r = pl.cdiv(n, lane)
    n_flat = r * lane

    x_flat = x.reshape(-1)
    if padded:
        x_flat = jnp.pad(x_flat, (0, n_flat - n))
    x2 = x_flat.reshape(r, lane)

    # Generation-aware VMEM budget: ~48 MiB on a 64 MiB part (v7x), ~96 MiB on
    # 128 MiB parts (v5e/v6e).  Block = as many rows as fit with in+out double
    # buffering, capped at 4096 rows, so per-grid-step overhead is amortized.
    vmem_cap = _vmem_capacity_bytes()
    vmem_budget = (48 << 20) if vmem_cap <= (64 << 20) else (96 << 20)
    vmem_budget = min(vmem_budget, max(vmem_cap - (8 << 20), 32 << 20))
    row_bytes = lane * itemsize
    budget_rows = max(sub, _round_down((vmem_budget - (4 << 20)) // (4 * row_bytes), sub))
    tile_cap = min(4096, budget_rows)

    if r <= sub:
        tile_rows = r  # full first dim -> always a legal block shape
    else:
        tile_rows = max(sub, _round_down(min(tile_cap, r), sub))
        # v7x has 2 TensorCores: make sure the "parallel" grid has >= 2 steps.
        if pl.cdiv(r, tile_rows) < 2:
            tile_rows = max(sub, _round_down(tile_rows // 2, sub))

    grid = (pl.cdiv(r, tile_rows),)
    block_bytes = tile_rows * row_bytes
    vmem_limit_bytes = int(min(4 * block_bytes + (8 << 20), vmem_budget))

    y2 = pl.pallas_call(
        _linreg_kernel,
        out_shape=jax.ShapeDtypeStruct((r, lane), out_dtype),
        grid_spec=pl.GridSpec(
            grid=grid,
            in_specs=[
                pl.BlockSpec(memory_space=pltpu.SMEM),              # weights (1,)
                pl.BlockSpec(memory_space=pltpu.SMEM),              # bias    (1,)
                pl.BlockSpec((tile_rows, lane), lambda i: (i, 0)),  # x tile
            ],
            out_specs=pl.BlockSpec((tile_rows, lane), lambda i: (i, 0)),
        ),
        compiler_params=pltpu.CompilerParams(
            dimension_semantics=("parallel",),
            vmem_limit_bytes=vmem_limit_bytes,
        ),
        cost_estimate=pl.CostEstimate(
            flops=2 * n_flat,
            transcendentals=0,
            bytes_accessed=2 * n_flat * itemsize,
        ),
    )(w, b, x2)

    if padded:
        return y2.reshape(-1)[:n].reshape(orig_shape)
    return y2.reshape(orig_shape)


if __name__ == "__main__":
    key = jax.random.PRNGKey(0)
    kw, kb, kx1, kx2, kx3, kx4 = jax.random.split(key, 6)

    # Deterministic "parameters" (mirrors torch.randn(1) init shapes).
    weights = jax.random.normal(kw, (1,), dtype=jnp.float32)
    bias = jax.random.normal(kb, (1,), dtype=jnp.float32)

    # 1) Lane-aligned input through the Pallas kernel: no pad, 2-step grid.
    x1 = jax.random.normal(kx1, (128, 1024), dtype=jnp.float32)
    y1 = jax.block_until_ready(
        linear_regression_forward(x1, weights, bias, min_pallas_elems=0))
    assert y1.shape == x1.shape
    assert jnp.allclose(y1, weights[0] * x1 + bias[0], atol=1e-6, rtol=1e-6)

    # 2) Ragged medium input forced through the Pallas path
    #    (minimal tail pad + masked partial last block).
    x2 = jax.random.normal(kx2, (100, 130), dtype=jnp.float32)
    y2 = jax.block_until_ready(
        linear_regression_forward(x2, weights, bias, min_pallas_elems=0))
    assert y2.shape == x2.shape
    assert jnp.allclose(y2, weights[0] * x2 + bias[0], atol=1e-6, rtol=1e-6)

    # 3) Small ragged input forced through the Pallas path (single tiny block).
    x3 = jax.random.normal(kx3, (7, 33), dtype=jnp.float32)
    y3 = jax.block_until_ready(
        linear_regression_forward(x3, weights, bias, min_pallas_elems=0))
    assert y3.shape == x3.shape
    assert jnp.allclose(y3, weights[0] * x3 + bias[0], atol=1e-6, rtol=1e-6)

    # 4) Small input with the default threshold -> jnp short-circuit path.
    x4 = jax.random.normal(kx4, (16, 128), dtype=jnp.float32)
    y4 = jax.block_until_ready(linear_regression_forward(x4, weights, bias))
    assert jnp.allclose(y4, weights[0] * x4 + bias[0], atol=1e-6, rtol=1e-6)

    print("KERNEL_OK")
</pallas_src>

<mosaic_0001>
module attributes {stable_mosaic.version = 11 : i64} {
  func.func @_linreg_kernel(%arg0: i32, %arg1: memref<1xf32, #tpu.memory_space<smem>>, %arg2: memref<1xf32, #tpu.memory_space<smem>>, %arg3: memref<64x1024xf32, #tpu.memory_space<vmem>>, %arg4: memref<64x1024xf32, #tpu.memory_space<vmem>>) attributes {dimension_semantics = [#tpu.dimension_semantics<parallel>], iteration_bounds = array<i64: 2>, scalar_prefetch = 0 : i64, scratch_operands = 0 : i64, tpu.core_type = #tpu.core_type<tc>, window_params = [{transform_indices = @transform_0, window_bounds = array<i64: 1>}, {transform_indices = @transform_1, window_bounds = array<i64: 1>}, {transform_indices = @transform_2, window_bounds = array<i64: 64, 1024>}, {transform_indices = @transform_3, window_bounds = array<i64: 64, 1024>}]} {
    %c0 = arith.constant 0 : index
    %0 = memref.load %arg1[%c0] : memref<1xf32, #tpu.memory_space<smem>>
    %c0_0 = arith.constant 0 : index
    %1 = memref.load %arg2[%c0_0] : memref<1xf32, #tpu.memory_space<smem>>
    %c0_1 = arith.constant 0 : index
    %c0_2 = arith.constant 0 : index
    %2 = vector.load %arg3[%c0_1, %c0_2] : memref<64x1024xf32, #tpu.memory_space<vmem>>, vector<64x1024xf32>
    %3 = vector.broadcast %0 : f32 to vector<64x1024xf32>
    %4 = arith.mulf %2, %3 : vector<64x1024xf32>
    %5 = vector.broadcast %1 : f32 to vector<64x1024xf32>
    %6 = arith.addf %4, %5 : vector<64x1024xf32>
    %c0_3 = arith.constant 0 : index
    %c0_4 = arith.constant 0 : index
    %7 = vector.load %arg4[%c0_3, %c0_4] : memref<64x1024xf32, #tpu.memory_space<vmem>>, vector<64x1024xf32>
    tpu.vector_store %arg4[%c0_3, %c0_4], %6 {strides = array<i32>} : memref<64x1024xf32, #tpu.memory_space<vmem>>, vector<64x1024xf32>,
    return
  }
  func.func @transform_0(%arg0: i32) -> i32 {
    %c0_i32 = arith.constant 0 : i32
    %c0_i32_0 = arith.constant 0 : i32
    return %c0_i32 : i32
  }
  func.func @transform_1(%arg0: i32) -> i32 {
    %c0_i32 = arith.constant 0 : i32
    %c0_i32_0 = arith.constant 0 : i32
    return %c0_i32 : i32
  }
  func.func @transform_2(%arg0: i32) -> (i32, i32) {
    %c0_i32 = arith.constant 0 : i32
    %c0_i32_0 = arith.constant 0 : i32
    return %arg0, %c0_i32 : i32, i32
  }
  func.func @transform_3(%arg0: i32) -> (i32, i32) {
    %c0_i32 = arith.constant 0 : i32
    %c0_i32_0 = arith.constant 0 : i32
    return %arg0, %c0_i32 : i32, i32
  }
}

</mosaic_0001>

<llo_original>
// kernel: tpu_custom_call.1
$region0: #{tpu_custom_call.1}
  #allocation0 [shape = 'u32[]', space=smem, size = 0x4, offset = 0x4, fixed_abs, tag = 'smem constant byte address 0x4 - core index']
  #allocation1 [shape = 'u32[72,128]{1,0:T(1,128)}', space=vmem, size = 0x9000, scoped, tag = 'internal scratch']
  #allocation2 [shape = 'f32[1]{0:T(128)S(6)}', space=smem, size = 0x200, scoped, tag = 'scoped memory for tpu_custom_call.1']
  #allocation3 [shape = 'f32[1]{0:T(128)S(6)}', space=smem, size = 0x200, scoped, tag = 'scoped memory for tpu_custom_call.1']
  %s0 = inlined_call_operand.<no memory space> [shape: f32[1], index: 0, kind: input, shape index: {}]
  %s1 = inlined_call_operand.<no memory space> [shape: f32[1], index: 1, kind: input, shape index: {}]
  %s2 = inlined_call_operand.hbm [shape: f32[128,1024], index: 2, kind: input, shape index: {}]
  %s3 = inlined_call_operand.hbm [shape: f32[128,1024], index: 3, kind: output, shape index: {}]
  %s4 = sld [smem:[#allocation0]]
  $region49: #{tpu_custom_call.1} parent=0
    _
  %s6 = ssub.s32 1, %s4
  %s7 = scalar_select 0, %s6, %s4
  %8 = sst [smem:[#allocation2]] %s0
  %9 = sst [smem:[#allocation3]] %s1
  $region1: #{tpu_custom_call.1} parent=0
    #allocation4 [shape = 'u8[524288]{0}', space=vmem, size = 0x80000, scoped, tag = 'input window, operand 2']
    #allocation5 [shape = 's32[2]{0}', space=sflag, size = 0x8, scoped, tag = 'scoped memory for tpu_custom_call.1']
    #allocation6 [shape = 's32[2]{0}', space=sflag, size = 0x8, scoped, tag = 'scoped memory for tpu_custom_call.1']
    #allocation7 [shape = 'u8[524288]{0}', space=vmem, size = 0x80000, scoped, tag = 'output window, operand 0']
    %10 = vsyncpa [#allocation5], 0
    %s11 = scalar_lea.sflag [#allocation5], 1
    %12 = vsyncpa %s11, 0
    %13 = vsyncpa [#allocation6], 0
    %s14 = scalar_lea.sflag [#allocation6], 1
    %15 = vsyncpa %s14, 0
    loop: start=0, step=1, limit=4
    $region2: #{tpu_custom_call.1} parent=1 // loop_pre_header
      _
    $region3: #{tpu_custom_call.1} parent=1 // loop_header
      %s17 = sphi 0, %s21
      %p18 = scmp.ge.s32.totalorder %s17, 4
      %s25 = sphi 0, %s25
      %s27 = sphi 0, %s25
      %s28 = sphi 0, %s27
      %s42 = sphi 0, %s28
      %s46 = sphi 0, %s46
      %s48 = sphi 0, %s46
      %s49 = sphi 0, %s48
      %s63 = sphi 0, %s49
      %s69 = sphi 0, %s71
      %s72 = sphi 0, %s69
      %s73 = sphi 0, %s72
      %s89 = sphi 0, %s73
      %s95 = sphi 0, %s97
      %s98 = sphi 0, %s95
      %s99 = sphi 0, %s98
      %s115 = sphi 0, %s99
    $region4: #{tpu_custom_call.1} parent=1 // loop_header_branch
      %20 = sbr.rel (%p18) target = $region8
    $region5: #{tpu_custom_call.1} parent=1 // loop_body
      %s22 = ssub.s32 %s17, 1
      %s23 = ssub.s32 %s17, 2
      %s24 = sadd.s32 %s17, 1
      %s26 = sadd.s32 %s25, 1
      %p29 = scmp.eq.s32.totalorder %s17, 1
      %p30 = scmp.ne.s32.totalorder %s25, %s27
      %p31 = scmp.eq.s32.totalorder %s17, 0
      %p32 = por %p30, %p31
      %p33 = scmp.ne.s32.totalorder %s25, %s27
      %p34 = scmp.eq.s32.totalorder %s22, 1
      %p35 = por %p33, %p34
      %p36 = scmp.ne.s32.totalorder %s27, %s28
      %p37 = scmp.eq.s32.totalorder %s22, 0
      %p38 = por %p36, %p37
      %p39 = scmp.ne.s32.totalorder %s27, %s28
      %p40 = scmp.eq.s32.totalorder %s23, 1
      %p41 = por %p39, %p40
      %p43 = scmp.ne.s32.totalorder %s28, %s42
      %p44 = scmp.eq.s32.totalorder %s23, 0
      %p45 = por %p43, %p44
      %s47 = sadd.s32 %s46, 1
      %p50 = scmp.eq.s32.totalorder %s17, 1
      %p51 = scmp.ne.s32.totalorder %s46, %s48
      %p52 = scmp.eq.s32.totalorder %s17, 0
      %p53 = por %p51, %p52
      %p54 = scmp.ne.s32.totalorder %s46, %s48
      %p55 = scmp.eq.s32.totalorder %s22, 1
      %p56 = por %p54, %p55
      %p57 = scmp.ne.s32.totalorder %s48, %s49
      %p58 = scmp.eq.s32.totalorder %s22, 0
      %p59 = por %p57, %p58
      %p60 = scmp.ne.s32.totalorder %s48, %s49
      %p61 = scmp.eq.s32.totalorder %s23, 1
      %p62 = por %p60, %p61
      %p64 = scmp.ne.s32.totalorder %s49, %s63
      %p65 = scmp.eq.s32.totalorder %s23, 0
      %p66 = por %p64, %p65
      %s67 = ssub.s32 %s17, %s24
      %p68 = scmp.eq.s32.totalorder %s67, 0
      %s70 = sadd.s32 %s69, 1
      %s71 = scalar_select %p68, %s69, %s70
      %p74 = pneg %p68
      %p75 = scmp.eq.s32.totalorder %s17, 1
      %p76 = por %p74, %p75
      %p77 = scmp.ne.s32.totalorder %s69, %s72
      %p78 = scmp.eq.s32.totalorder %s17, 0
      %p79 = por %p77, %p78
      %p80 = scmp.ne.s32.totalorder %s69, %s72
      %p81 = scmp.eq.s32.totalorder %s22, 1
      %p82 = por %p80, %p81
      %p83 = scmp.ne.s32.totalorder %s72, %s73
      %p84 = scmp.eq.s32.totalorder %s22, 0
      %p85 = por %p83, %p84
      %p86 = scmp.ne.s32.totalorder %s72, %s73
      %p87 = scmp.eq.s32.totalorder %s23, 1
      %p88 = por %p86, %p87
      %p90 = scmp.ne.s32.totalorder %s73, %s89
      %p91 = scmp.eq.s32.totalorder %s23, 0
      %p92 = por %p90, %p91
      %s93 = ssub.s32 %s17, %s24
      %p94 = scmp.eq.s32.totalorder %s93, 0
      %s96 = sadd.s32 %s95, 1
      %s97 = scalar_select %p94, %s95, %s96
      %p100 = pneg %p94
      %p101 = scmp.eq.s32.totalorder %s17, 1
      %p102 = por %p100, %p101
      %p103 = scmp.ne.s32.totalorder %s95, %s98
      %p104 = scmp.eq.s32.totalorder %s17, 0
      %p105 = por %p103, %p104
      %p106 = scmp.ne.s32.totalorder %s95, %s98
      %p107 = scmp.eq.s32.totalorder %s22, 1
      %p108 = por %p106, %p107
      %p109 = scmp.ne.s32.totalorder %s98, %s99
      %p110 = scmp.eq.s32.totalorder %s22, 0
      %p111 = por %p109, %p110
      %p112 = scmp.ne.s32.totalorder %s98, %s99
      %p113 = scmp.eq.s32.totalorder %s23, 1
      %p114 = por %p112, %p113
      %p116 = scmp.ne.s32.totalorder %s99, %s115
      %p117 = scmp.eq.s32.totalorder %s23, 0
      %p118 = por %p116, %p117
      %p119 = scmp.le.s32.totalorder 1, %s17
      %p120 = scmp.lt.s32.totalorder %s17, 3
      %p121 = pnand %p119, %p120
      %p122 = pneg %p121
      // Predicated region
      $region9: #{tpu_custom_call.1} parent=5 // pred_check
        _
      $region10: #{tpu_custom_call.1} parent=5 // pred_check_branch
        %124 = sbr.rel (%p121) target = $region12
      $region11: #{tpu_custom_call.1} parent=5 // pred_region
        %s125 = ssub.s32 %s17, 1
        // Predicated region
        $region13: #{tpu_custom_call.1} parent=11 // pred_check
          %p126 = pneg %p38
        $region14: #{tpu_custom_call.1} parent=11 // pred_check_branch
          %128 = sbr.rel (%p126) target = $region16
        $region15: #{tpu_custom_call.1} parent=11 // pred_region
          _
        $region16: #{tpu_custom_call.1} parent=11 // pred_fallthru
          _
        // Predicated region
        $region17: #{tpu_custom_call.1} parent=11 // pred_check
          %p129 = pneg %p59
        $region18: #{tpu_custom_call.1} parent=11 // pred_check_branch
          %131 = sbr.rel (%p129) target = $region20
        $region19: #{tpu_custom_call.1} parent=11 // pred_region
          _
        $region20: #{tpu_custom_call.1} parent=11 // pred_fallthru
          _
      $region12: #{tpu_custom_call.1} parent=5 // pred_fallthru
        _
      %p132 = scmp.lt.s32.totalorder %s17, 2
      // Predicated region
      $region21: #{tpu_custom_call.1} parent=5 // pred_check
        %p133 = pneg %p132
      $region22: #{tpu_custom_call.1} parent=5 // pred_check_branch
        %135 = sbr.rel (%p133) target = $region24
      $region23: #{tpu_custom_call.1} parent=5 // pred_region
        // Predicated region
        $region25: #{tpu_custom_call.1} parent=23 // pred_check
          %p136 = pneg %p79
        $region26: #{tpu_custom_call.1} parent=23 // pred_check_branch
          %138 = sbr.rel (%p136) target = $region28
        $region27: #{tpu_custom_call.1} parent=23 // pred_region
          %s139 = sand.u32 %s69, 1
          %s140 = scalar_lea.sflag [#allocation5], %s139
          %s141 = sand.u32 %s69, 1
          %s142 = smul.addr %s141, 512
          %s143 = scalar_lea.vmem [#allocation4], %s142
          %s144 = smul.u32 8, %s17
          %146 = vsyncadd %s140, 0
          %s147 = smul.addr %s144, 8
          %s148 = smul.addr %s147, 8
          %s149 = scalar_lea.hbm %s2, %s148
          %s150 = sshll.u32 %s149, 4
          %s151 = int_to_ptr.hbm [resolvable:$true] %s150
          %s152 = sshll.u32 %s143, 4
          %s153 = int_to_ptr.vmem [resolvable:$true] %s152
          %158 = dma.hbm_to_vmem [thread:$0]  %s151, 8192, %s153, %s140, 1024, 1024, 64
        $region28: #{tpu_custom_call.1} parent=23 // pred_fallthru
          _
      $region24: #{tpu_custom_call.1} parent=5 // pred_fallthru
        _
      %p159 = scmp.le.s32.totalorder 1, %s17
      %p160 = scmp.lt.s32.totalorder %s17, 3
      %p161 = pnand %p159, %p160
      %p162 = pneg %p161
      // Predicated region
      $region29: #{tpu_custom_call.1} parent=5 // pred_check
        _
      $region30: #{tpu_custom_call.1} parent=5 // pred_check_branch
        %164 = sbr.rel (%p161) target = $region32
      $region31: #{tpu_custom_call.1} parent=5 // pred_region
        %s165 = ssub.s32 %s17, 1
        %s166 = sand.u32 %s72, 1
        %s167 = scalar_lea.sflag [#allocation5], %s166
        %s168 = sand.u32 %s72, 1
        %s169 = smul.addr %s168, 512
        %s170 = scalar_lea.vmem [#allocation4], %s169
        // Predicated region
        $region33: #{tpu_custom_call.1} parent=31 // pred_check
          %p171 = pneg %p85
        $region34: #{tpu_custom_call.1} parent=31 // pred_check_branch
          %173 = sbr.rel (%p171) target = $region36
        $region35: #{tpu_custom_call.1} parent=31 // pred_region
          %175 = dma.done %s167, 8192
        $region36: #{tpu_custom_call.1} parent=31 // pred_fallthru
          _
        %p176 = pneg %p38
        %p177 = pneg %p35
        %p178 = pneg %p59
        %p179 = pneg %p56
        %s180 = sand.u32 %s72, 1
        %s181 = scalar_lea.sflag [#allocation5], %s180
        %s182 = sand.u32 %s72, 1
        %s183 = smul.addr %s182, 512
        %s184 = scalar_lea.vmem [#allocation4], %s183
        %p185 = pneg %p85
        %p186 = pneg %p82
        %p187 = pneg %p111
        %p188 = pneg %p108
        %s189 = sand.u32 %s98, 1
        %s190 = scalar_lea.sflag [#allocation6], %s189
        %s191 = sand.u32 %s98, 1
        %s192 = smul.addr %s191, 512
        %s193 = scalar_lea.vmem [#allocation7], %s192
        %s194 = smul.u32 8, %s22
        %s195 = smul.u32 8, %s22
        %s196 = sld [smem:[#allocation2]]
        %s197 = sld [smem:[#allocation3]]
        %v198 = vld [vmem:[%s170] sm:$0xff]
        %v199 = vld [vmem:[%s170 + $0x8] sm:$0xff]
        %v200 = vld [vmem:[%s170 + $0x10] sm:$0xff]
        %v201 = vld [vmem:[%s170 + $0x18] sm:$0xff]
        %v202 = vld [vmem:[%s170 + $0x20] sm:$0xff]
        %v203 = vld [vmem:[%s170 + $0x28] sm:$0xff]
        %v204 = vld [vmem:[%s170 + $0x30] sm:$0xff]
        %v205 = vld [vmem:[%s170 + $0x38] sm:$0xff]
        %v206 = vld [vmem:[%s170 + $0x40] sm:$0xff]
        %v207 = vld [vmem:[%s170 + $0x48] sm:$0xff]
        %v208 = vld [vmem:[%s170 + $0x50] sm:$0xff]
        %v209 = vld [vmem:[%s170 + $0x58] sm:$0xff]
        %v210 = vld [vmem:[%s170 + $0x60] sm:$0xff]
        %v211 = vld [vmem:[%s170 + $0x68] sm:$0xff]
        %v212 = vld [vmem:[%s170 + $0x70] sm:$0xff]
        %v213 = vld [vmem:[%s170 + $0x78] sm:$0xff]
        %v214 = vld [vmem:[%s170 + $0x80] sm:$0xff]
        %v215 = vld [vmem:[%s170 + $0x88] sm:$0xff]
        %v216 = vld [vmem:[%s170 + $0x90] sm:$0xff]
        %v217 = vld [vmem:[%s170 + $0x98] sm:$0xff]
        %v218 = vld [vmem:[%s170 + $0xa0] sm:$0xff]
        %v219 = vld [vmem:[%s170 + $0xa8] sm:$0xff]
        %v220 = vld [vmem:[%s170 + $0xb0] sm:$0xff]
        %v221 = vld [vmem:[%s170 + $0xb8] sm:$0xff]
        %v222 = vld [vmem:[%s170 + $0xc0] sm:$0xff]
        %v223 = vld [vmem:[%s170 + $0xc8] sm:$0xff]
        %v224 = vld [vmem:[%s170 + $0xd0] sm:$0xff]
        %v225 = vld [vmem:[%s170 + $0xd8] sm:$0xff]
        %v226 = vld [vmem:[%s170 + $0xe0] sm:$0xff]
        %v227 = vld [vmem:[%s170 + $0xe8] sm:$0xff]
        %v228 = vld [vmem:[%s170 + $0xf0] sm:$0xff]
        %v229 = vld [vmem:[%s170 + $0xf8] sm:$0xff]
        %v230 = vld [vmem:[%s170 + $0x100] sm:$0xff]
        %v231 = vld [vmem:[%s170 + $0x108] sm:$0xff]
        %v232 = vld [vmem:[%s170 + $0x110] sm:$0xff]
        %v233 = vld [vmem:[%s170 + $0x118] sm:$0xff]
        %v234 = vld [vmem:[%s170 + $0x120] sm:$0xff]
        %v235 = vld [vmem:[%s170 + $0x128] sm:$0xff]
        %v236 = vld [vmem:[%s170 + $0x130] sm:$0xff]
        %v237 = vld [vmem:[%s170 + $0x138] sm:$0xff]
        %v238 = vld [vmem:[%s170 + $0x140] sm:$0xff]
        %v239 = vld [vmem:[%s170 + $0x148] sm:$0xff]
        %v240 = vld [vmem:[%s170 + $0x150] sm:$0xff]
        %v241 = vld [vmem:[%s170 + $0x158] sm:$0xff]
        %v242 = vld [vmem:[%s170 + $0x160] sm:$0xff]
        %v243 = vld [vmem:[%s170 + $0x168] sm:$0xff]
        %v244 = vld [vmem:[%s170 + $0x170] sm:$0xff]
        %v245 = vld [vmem:[%s170 + $0x178] sm:$0xff]
        %v246 = vld [vmem:[%s170 + $0x180] sm:$0xff]
        %v247 = vld [vmem:[%s170 + $0x188] sm:$0xff]
        %v248 = vld [vmem:[%s170 + $0x190] sm:$0xff]
        %v249 = vld [vmem:[%s170 + $0x198] sm:$0xff]
        %v250 = vld [vmem:[%s170 + $0x1a0] sm:$0xff]
        %v251 = vld [vmem:[%s170 + $0x1a8] sm:$0xff]
        %v252 = vld [vmem:[%s170 + $0x1b0] sm:$0xff]
        %v253 = vld [vmem:[%s170 + $0x1b8] sm:$0xff]
        %v254 = vld [vmem:[%s170 + $0x1c0] sm:$0xff]
        %v255 = vld [vmem:[%s170 + $0x1c8] sm:$0xff]
        %v256 = vld [vmem:[%s170 + $0x1d0] sm:$0xff]
        %v257 = vld [vmem:[%s170 + $0x1d8] sm:$0xff]
        %v258 = vld [vmem:[%s170 + $0x1e0] sm:$0xff]
        %v259 = vld [vmem:[%s170 + $0x1e8] sm:$0xff]
        %v260 = vld [vmem:[%s170 + $0x1f0] sm:$0xff]
        %v261 = vld [vmem:[%s170 + $0x1f8] sm:$0xff]
        %v262 = vstv %s196
        %v263 = vmul.f32 %v198, %v262
        %v264 = vmul.f32 %v199, %v262
        %v265 = vmul.f32 %v200, %v262
        %v266 = vmul.f32 %v201, %v262
        %v267 = vmul.f32 %v202, %v262
        %v268 = vmul.f32 %v203, %v262
        %v269 = vmul.f32 %v204, %v262
        %v270 = vmul.f32 %v205, %v262
        %v271 = vmul.f32 %v206, %v262
        %v272 = vmul.f32 %v207, %v262
        %v273 = vmul.f32 %v208, %v262
        %v274 = vmul.f32 %v209, %v262
        %v275 = vmul.f32 %v210, %v262
        %v276 = vmul.f32 %v211, %v262
        %v277 = vmul.f32 %v212, %v262
        %v278 = vmul.f32 %v213, %v262
        %v279 = vmul.f32 %v214, %v262
        %v280 = vmul.f32 %v215, %v262
        %v281 = vmul.f32 %v216, %v262
        %v282 = vmul.f32 %v217, %v262
        %v283 = vmul.f32 %v218, %v262
        %v284 = vmul.f32 %v219, %v262
        %v285 = vmul.f32 %v220, %v262
        %v286 = vmul.f32 %v221, %v262
        %v287 = vmul.f32 %v222, %v262
        %v288 = vmul.f32 %v223, %v262
        %v289 = vmul.f32 %v224, %v262
        %v290 = vmul.f32 %v225, %v262
        %v291 = vmul.f32 %v226, %v262
        %v292 = vmul.f32 %v227, %v262
        %v293 = vmul.f32 %v228, %v262
        %v294 = vmul.f32 %v229, %v262
        %v295 = vmul.f32 %v230, %v262
        %v296 = vmul.f32 %v231, %v262
        %v297 = vmul.f32 %v232, %v262
        %v298 = vmul.f32 %v233, %v262
        %v299 = vmul.f32 %v234, %v262
        %v300 = vmul.f32 %v235, %v262
        %v301 = vmul.f32 %v236, %v262
        %v302 = vmul.f32 %v237, %v262
        %v303 = vmul.f32 %v238, %v262
        %v304 = vmul.f32 %v239, %v262
        %v305 = vmul.f32 %v240, %v262
        %v306 = vmul.f32 %v241, %v262
        %v307 = vmul.f32 %v242, %v262
        %v308 = vmul.f32 %v243, %v262
        %v309 = vmul.f32 %v244, %v262
        %v310 = vmul.f32 %v245, %v262
        %v311 = vmul.f32 %v246, %v262
        %v312 = vmul.f32 %v247, %v262
        %v313 = vmul.f32 %v248, %v262
        %v314 = vmul.f32 %v249, %v262
        %v315 = vmul.f32 %v250, %v262
        %v316 = vmul.f32 %v251, %v262
        %v317 = vmul.f32 %v252, %v262
        %v318 = vmul.f32 %v253, %v262
        %v319 = vmul.f32 %v254, %v262
        %v320 = vmul.f32 %v255, %v262
        %v321 = vmul.f32 %v256, %v262
        %v322 = vmul.f32 %v257, %v262
        %v323 = vmul.f32 %v258, %v262
        %v324 = vmul.f32 %v259, %v262
        %v325 = vmul.f32 %v260, %v262
        %v326 = vmul.f32 %v261, %v262
        %v327 = vstv %s197
        %v328 = vadd.f32 %v263, %v327
        %v329 = vadd.f32 %v264, %v327
        %v330 = vadd.f32 %v265, %v327
        %v331 = vadd.f32 %v266, %v327
        %v332 = vadd.f32 %v267, %v327
        %v333 = vadd.f32 %v268, %v327
        %v334 = vadd.f32 %v269, %v327
        %v335 = vadd.f32 %v270, %v327
        %v336 = vadd.f32 %v271, %v327
        %v337 = vadd.f32 %v272, %v327
        %v338 = vadd.f32 %v273, %v327
        %v339 = vadd.f32 %v274, %v327
        %v340 = vadd.f32 %v275, %v327
        %v341 = vadd.f32 %v276, %v327
        %v342 = vadd.f32 %v277, %v327
        %v343 = vadd.f32 %v278, %v327
        %v344 = vadd.f32 %v279, %v327
        %v345 = vadd.f32 %v280, %v327
        %v346 = vadd.f32 %v281, %v327
        %v347 = vadd.f32 %v282, %v327
        %v348 = vadd.f32 %v283, %v327
        %v349 = vadd.f32 %v284, %v327
        %v350 = vadd.f32 %v285, %v327
        %v351 = vadd.f32 %v286, %v327
        %v352 = vadd.f32 %v287, %v327
        %v353 = vadd.f32 %v288, %v327
        %v354 = vadd.f32 %v289, %v327
        %v355 = vadd.f32 %v290, %v327
        %v356 = vadd.f32 %v291, %v327
        %v357 = vadd.f32 %v292, %v327
        %v358 = vadd.f32 %v293, %v327
        %v359 = vadd.f32 %v294, %v327
        %v360 = vadd.f32 %v295, %v327
        %v361 = vadd.f32 %v296, %v327
        %v362 = vadd.f32 %v297, %v327
        %v363 = vadd.f32 %v298, %v327
        %v364 = vadd.f32 %v299, %v327
        %v365 = vadd.f32 %v300, %v327
        %v366 = vadd.f32 %v301, %v327
        %v367 = vadd.f32 %v302, %v327
        %v368 = vadd.f32 %v303, %v327
        %v369 = vadd.f32 %v304, %v327
        %v370 = vadd.f32 %v305, %v327
        %v371 = vadd.f32 %v306, %v327
        %v372 = vadd.f32 %v307, %v327
        %v373 = vadd.f32 %v308, %v327
        %v374 = vadd.f32 %v309, %v327
        %v375 = vadd.f32 %v310, %v327
        %v376 = vadd.f32 %v311, %v327
        %v377 = vadd.f32 %v312, %v327
        %v378 = vadd.f32 %v313, %v327
        %v379 = vadd.f32 %v314, %v327
        %v380 = vadd.f32 %v315, %v327
        %v381 = vadd.f32 %v316, %v327
        %v382 = vadd.f32 %v317, %v327
        %v383 = vadd.f32 %v318, %v327
        %v384 = vadd.f32 %v319, %v327
        %v385 = vadd.f32 %v320, %v327
        %v386 = vadd.f32 %v321, %v327
        %v387 = vadd.f32 %v322, %v327
        %v388 = vadd.f32 %v323, %v327
        %v389 = vadd.f32 %v324, %v327
        %v390 = vadd.f32 %v325, %v327
        %v391 = vadd.f32 %v326, %v327
        %392 = vst [vmem:[%s193] sm:$0xff] %v328
        %393 = vst [vmem:[%s193 + $0x8] sm:$0xff] %v329
        %394 = vst [vmem:[%s193 + $0x10] sm:$0xff] %v330
        %395 = vst [vmem:[%s193 + $0x18] sm:$0xff] %v331
        %396 = vst [vmem:[%s193 + $0x20] sm:$0xff] %v332
        %397 = vst [vmem:[%s193 + $0x28] sm:$0xff] %v333
        %398 = vst [vmem:[%s193 + $0x30] sm:$0xff] %v334
        %399 = vst [vmem:[%s193 + $0x38] sm:$0xff] %v335
        %400 = vst [vmem:[%s193 + $0x40] sm:$0xff] %v336
        %401 = vst [vmem:[%s193 + $0x48] sm:$0xff] %v337
        %402 = vst [vmem:[%s193 + $0x50] sm:$0xff] %v338
        %403 = vst [vmem:[%s193 + $0x58] sm:$0xff] %v339
        %404 = vst [vmem:[%s193 + $0x60] sm:$0xff] %v340
        %405 = vst [vmem:[%s193 + $0x68] sm:$0xff] %v341
        %406 = vst [vmem:[%s193 + $0x70] sm:$0xff] %v342
        %407 = vst [vmem:[%s193 + $0x78] sm:$0xff] %v343
        %408 = vst [vmem:[%s193 + $0x80] sm:$0xff] %v344
        %409 = vst [vmem:[%s193 + $0x88] sm:$0xff] %v345
        %410 = vst [vmem:[%s193 + $0x90] sm:$0xff] %v346
        %411 = vst [vmem:[%s193 + $0x98] sm:$0xff] %v347
        %412 = vst [vmem:[%s193 + $0xa0] sm:$0xff] %v348
        %413 = vst [vmem:[%s193 + $0xa8] sm:$0xff] %v349
        %414 = vst [vmem:[%s193 + $0xb0] sm:$0xff] %v350
        %415 = vst [vmem:[%s193 + $0xb8] sm:$0xff] %v351
        %416 = vst [vmem:[%s193 + $0xc0] sm:$0xff] %v352
        %417 = vst [vmem:[%s193 + $0xc8] sm:$0xff] %v353
        %418 = vst [vmem:[%s193 + $0xd0] sm:$0xff] %v354
        %419 = vst [vmem:[%s193 + $0xd8] sm:$0xff] %v355
        %420 = vst [vmem:[%s193 + $0xe0] sm:$0xff] %v356
        %421 = vst [vmem:[%s193 + $0xe8] sm:$0xff] %v357
        %422 = vst [vmem:[%s193 + $0xf0] sm:$0xff] %v358
        %423 = vst [vmem:[%s193 + $0xf8] sm:$0xff] %v359
        %424 = vst [vmem:[%s193 + $0x100] sm:$0xff] %v360
        %425 = vst [vmem:[%s193 + $0x108] sm:$0xff] %v361
        %426 = vst [vmem:[%s193 + $0x110] sm:$0xff] %v362
        %427 = vst [vmem:[%s193 + $0x118] sm:$0xff] %v363
        %428 = vst [vmem:[%s193 + $0x120] sm:$0xff] %v364
        %429 = vst [vmem:[%s193 + $0x128] sm:$0xff] %v365
        %430 = vst [vmem:[%s193 + $0x130] sm:$0xff] %v366
        %431 = vst [vmem:[%s193 + $0x138] sm:$0xff] %v367
        %432 = vst [vmem:[%s193 + $0x140] sm:$0xff] %v368
        %433 = vst [vmem:[%s193 + $0x148] sm:$0xff] %v369
        %434 = vst [vmem:[%s193 + $0x150] sm:$0xff] %v370
        %435 = vst [vmem:[%s193 + $0x158] sm:$0xff] %v371
        %436 = vst [vmem:[%s193 + $0x160] sm:$0xff] %v372
        %437 = vst [vmem:[%s193 + $0x168] sm:$0xff] %v373
        %438 = vst [vmem:[%s193 + $0x170] sm:$0xff] %v374
        %439 = vst [vmem:[%s193 + $0x178] sm:$0xff] %v375
        %440 = vst [vmem:[%s193 + $0x180] sm:$0xff] %v376
        %441 = vst [vmem:[%s193 + $0x188] sm:$0xff] %v377
        %442 = vst [vmem:[%s193 + $0x190] sm:$0xff] %v378
        %443 = vst [vmem:[%s193 + $0x198] sm:$0xff] %v379
        %444 = vst [vmem:[%s193 + $0x1a0] sm:$0xff] %v380
        %445 = vst [vmem:[%s193 + $0x1a8] sm:$0xff] %v381
        %446 = vst [vmem:[%s193 + $0x1b0] sm:$0xff] %v382
        %447 = vst [vmem:[%s193 + $0x1b8] sm:$0xff] %v383
        %448 = vst [vmem:[%s193 + $0x1c0] sm:$0xff] %v384
        %449 = vst [vmem:[%s193 + $0x1c8] sm:$0xff] %v385
        %450 = vst [vmem:[%s193 + $0x1d0] sm:$0xff] %v386
        %451 = vst [vmem:[%s193 + $0x1d8] sm:$0xff] %v387
        %452 = vst [vmem:[%s193 + $0x1e0] sm:$0xff] %v388
        %453 = vst [vmem:[%s193 + $0x1e8] sm:$0xff] %v389
        %454 = vst [vmem:[%s193 + $0x1f0] sm:$0xff] %v390
        %455 = vst [vmem:[%s193 + $0x1f8] sm:$0xff] %v391
        %s456 = sand.u32 %s98, 1
        %s457 = scalar_lea.sflag [#allocation6], %s456
        %s458 = sand.u32 %s98, 1
        %s459 = smul.addr %s458, 512
        %s460 = scalar_lea.vmem [#allocation7], %s459
        // Predicated region
        $region37: #{tpu_custom_call.1} parent=31 // pred_check
          %p461 = pneg %p108
        $region38: #{tpu_custom_call.1} parent=31 // pred_check_branch
          %463 = sbr.rel (%p461) target = $region40
        $region39: #{tpu_custom_call.1} parent=31 // pred_region
          %s464 = smul.u32 8, %s22
          %466 = vsyncadd %s457, 0
          %s467 = smul.addr %s464, 8
          %s468 = smul.addr %s467, 8
          %s469 = scalar_lea.hbm %s3, %s468
          %s470 = sshll.u32 %s460, 4
          %s471 = int_to_ptr.vmem [resolvable:$true] %s470
          %s472 = sshll.u32 %s469, 4
          %s473 = int_to_ptr.hbm [resolvable:$true] %s472
          %478 = dma.vmem_to_hbm [thread:$0]  %s471, 8192, %s473, %s457, 1024, 1024, 64
        $region40: #{tpu_custom_call.1} parent=31 // pred_fallthru
          _
      $region32: #{tpu_custom_call.1} parent=5 // pred_fallthru
        _
      %p479 = scmp.le.s32.totalorder 2, %s17
      // Predicated region
      $region41: #{tpu_custom_call.1} parent=5 // pred_check
        %p480 = pneg %p479
      $region42: #{tpu_custom_call.1} parent=5 // pred_check_branch
        %482 = sbr.rel (%p480) target = $region44
      $region43: #{tpu_custom_call.1} parent=5 // pred_region
        %s483 = ssub.s32 %s17, 2
        // Predicated region
        $region45: #{tpu_custom_call.1} parent=43 // pred_check
          %p484 = pneg %p114
        $region46: #{tpu_custom_call.1} parent=43 // pred_check_branch
          %486 = sbr.rel (%p484) target = $region48
        $region47: #{tpu_custom_call.1} parent=43 // pred_region
          %s487 = sand.u32 %s99, 1
          %s488 = scalar_lea.sflag [#allocation6], %s487
          %s489 = sand.u32 %s99, 1
          %s490 = smul.addr %s489, 512
          %s491 = scalar_lea.vmem [#allocation7], %s490
          %493 = dma.done %s488, 8192
        $region48: #{tpu_custom_call.1} parent=43 // pred_fallthru
          _
      $region44: #{tpu_custom_call.1} parent=5 // pred_fallthru
        _
    $region6: #{tpu_custom_call.1} parent=1 // loop_footer
      %s21 = sadd.s32 1, %s17
    $region7: #{tpu_custom_call.1} parent=1 // loop_footer_branch
      %16 = sbr.rel target = $region3
    $region8: #{tpu_custom_call.1} parent=1 // loop_exit
      _
    %494 = vsyncpa [#allocation5], 1
    %s495 = scalar_lea.sflag [#allocation5], 1
    %496 = vsyncpa %s495, 1
    %497 = vsyncpa [#allocation6], 1
    %s498 = scalar_lea.sflag [#allocation6], 1
    %499 = vsyncpa %s498, 1

</llo_original>
